<compile_context>
chip_gen: v7x
topology: tpu7x:2x2x1
jax: 0.10.0
libtpu: 0.0.40
codegen_flags: <defaults>
</compile_context>

<pallas_src>
import functools

import jax
import jax.numpy as jnp
from jax.experimental import pallas as pl
from jax.experimental.pallas import tpu as pltpu

N_INPUT = 2
N_HIDDEN = 32
N_CLASSES = 3


def _round_up(x, m):
    return ((x + m - 1) // m) * m


def winenet_kernel(x_ref, w1_ref, b1_ref, w2_ref, b2_ref, w3_ref, b3_ref,
                   out_ref, *, apply_softmax):
    # x_ref: (N_INPUT, TB); weights in PyTorch (out, in) layout; biases (out, 1).
    x = x_ref[...].astype(jnp.float32)            # (2, TB)
    w1 = w1_ref[...].astype(jnp.float32)          # (32, 2)
    b1 = b1_ref[...].astype(jnp.float32)          # (32, 1)

    # fc1: K=2 is far too small for the MXU -> two VPU broadcast-FMAs instead.
    h1 = w1[:, 0:1] * x[0:1, :] + w1[:, 1:2] * x[1:2, :] + b1   # (32, TB)
    h1 = jax.nn.sigmoid(h1)                       # sigmoid in f32 (v5e-safe)

    # fc2 + sigmoid (MXU, f32 accumulation).
    h2 = jnp.dot(w2_ref[...], h1.astype(w2_ref.dtype),
                 preferred_element_type=jnp.float32)            # (32, TB)
    h2 = jax.nn.sigmoid(h2 + b2_ref[...].astype(jnp.float32))

    # fc3 (MXU) -> logits (3, TB).
    logits = jnp.dot(w3_ref[...], h2.astype(w3_ref.dtype),
                     preferred_element_type=jnp.float32)
    logits = logits + b3_ref[...].astype(jnp.float32)

    if apply_softmax:
        # Fused inference-time softmax over the class axis (axis 0, size 3).
        m = jnp.max(logits, axis=0, keepdims=True)
        e = jnp.exp(logits - m)
        s = jnp.sum(e, axis=0, keepdims=True)
        logits = e * pl.reciprocal(s, approx=False)

    out_ref[...] = logits.astype(out_ref.dtype)


def winenet_forward(x, params, *, tb=512, apply_softmax=False,
                    compute_dtype=jnp.float32):
    """x: (B, N_INPUT) -> (B, N_CLASSES) logits (or probabilities if apply_softmax)."""
    B = x.shape[0]
    cd = jnp.dtype(compute_dtype)

    tb = _round_up(tb, 128)
    tb_eff = min(tb, _round_up(max(B, 1), 128))   # don't over-pad tiny batches
    Bp = _round_up(B, tb_eff)

    # Lane-dense transposed layout: batch on lanes. Zero-pad batch up to Bp.
    xt = jnp.pad(x.astype(cd).T, ((0, 0), (0, Bp - B)))         # (N_INPUT, Bp)

    w1 = params["w1"].astype(cd)                                # (32, 2)
    b1 = params["b1"].reshape(N_HIDDEN, 1).astype(cd)
    w2 = params["w2"].astype(cd)                                # (32, 32)
    b2 = params["b2"].reshape(N_HIDDEN, 1).astype(cd)
    w3 = params["w3"].astype(cd)                                # (3, 32)
    b3 = params["b3"].reshape(N_CLASSES, 1).astype(cd)

    const = lambda i: (0, 0)          # weights stay resident, never re-DMA'd
    grid = (Bp // tb_eff,)

    flops = 2 * Bp * (N_INPUT * N_HIDDEN + N_HIDDEN * N_HIDDEN
                      + N_HIDDEN * N_CLASSES)
    transc = Bp * (2 * N_HIDDEN + (N_CLASSES if apply_softmax else 0))
    weight_bytes = sum(int(a.size) * a.dtype.itemsize
                       for a in (w1, b1, w2, b2, w3, b3))
    bytes_accessed = (N_INPUT + N_CLASSES) * Bp * cd.itemsize + weight_bytes

    out_t = pl.pallas_call(
        functools.partial(winenet_kernel, apply_softmax=apply_softmax),
        out_shape=jax.ShapeDtypeStruct((N_CLASSES, Bp), cd),
        grid=grid,
        in_specs=[
            pl.BlockSpec((N_INPUT, tb_eff), lambda i: (0, i)),   # x tiles (pipelined)
            pl.BlockSpec((N_HIDDEN, N_INPUT), const),
            pl.BlockSpec((N_HIDDEN, 1), const),
            pl.BlockSpec((N_HIDDEN, N_HIDDEN), const),
            pl.BlockSpec((N_HIDDEN, 1), const),
            pl.BlockSpec((N_CLASSES, N_HIDDEN), const),
            pl.BlockSpec((N_CLASSES, 1), const),
        ],
        out_specs=pl.BlockSpec((N_CLASSES, tb_eff), lambda i: (0, i)),
        compiler_params=pltpu.CompilerParams(
            dimension_semantics=("parallel",)),   # megacore on v7x; harmless elsewhere
        cost_estimate=pl.CostEstimate(
            flops=flops, transcendentals=transc, bytes_accessed=bytes_accessed),
    )(xt, w1, b1, w2, b2, w3, b3)

    return out_t[:, :B].T


def init_params(key):
    """Deterministic PyTorch-style init: W (out, in), b (out,), U(-1/sqrt(fan_in), +)."""
    ks = jax.random.split(key, 6)

    def lin(kw, kb, fan_in, fan_out):
        bound = float(1.0 / (fan_in ** 0.5))
        w = jax.random.uniform(kw, (fan_out, fan_in), jnp.float32, -bound, bound)
        b = jax.random.uniform(kb, (fan_out,), jnp.float32, -bound, bound)
        return w, b

    w1, b1 = lin(ks[0], ks[1], N_INPUT, N_HIDDEN)
    w2, b2 = lin(ks[2], ks[3], N_HIDDEN, N_HIDDEN)
    w3, b3 = lin(ks[4], ks[5], N_HIDDEN, N_CLASSES)
    return dict(w1=w1, b1=b1, w2=w2, b2=b2, w3=w3, b3=b3)


def winenet_forward_ref(x, p, apply_softmax=False):
    h1 = jax.nn.sigmoid(x @ p["w1"].T + p["b1"])
    h2 = jax.nn.sigmoid(h1 @ p["w2"].T + p["b2"])
    logits = h2 @ p["w3"].T + p["b3"]
    return jax.nn.softmax(logits, axis=1) if apply_softmax else logits


if __name__ == "__main__":
    key = jax.random.PRNGKey(0)
    k_x, k_p = jax.random.split(key)

    B = 8
    x = jax.random.normal(k_x, (B, N_INPUT), jnp.float32)
    params = init_params(k_p)

    # forward(): logits (f32 path, strict check).
    logits = jax.block_until_ready(winenet_forward(x, params))
    ref_logits = winenet_forward_ref(x, params)
    assert logits.shape == (B, N_CLASSES)
    assert jnp.allclose(logits, ref_logits, atol=1e-5, rtol=1e-4), "logits mismatch"

    # inference(): softmax fused into the kernel epilogue.
    probs = jax.block_until_ready(winenet_forward(x, params, apply_softmax=True))
    ref_probs = winenet_forward_ref(x, params, apply_softmax=True)
    assert jnp.allclose(probs, ref_probs, atol=1e-5, rtol=1e-4), "probs mismatch"
    assert jnp.allclose(jnp.sum(probs, axis=1), 1.0, atol=1e-5)

    # bf16 compute path (halves HBM traffic on v6e/v7x; sigmoid stays in f32).
    logits_bf16 = jax.block_until_ready(
        winenet_forward(x, params, compute_dtype=jnp.bfloat16))
    assert jnp.allclose(logits_bf16.astype(jnp.float32), ref_logits,
                        atol=1e-1, rtol=1e-1), "bf16 logits mismatch"

    print("KERNEL_OK")
</pallas_src>

<mosaic_0001>
module attributes {stable_mosaic.version = 11 : i64} {
  func.func @winenet_kernel(%arg0: i32, %arg1: memref<2x128xf32, #tpu.memory_space<vmem>>, %arg2: memref<32x2xf32, #tpu.memory_space<vmem>>, %arg3: memref<32x1xf32, #tpu.memory_space<vmem>>, %arg4: memref<32x32xf32, #tpu.memory_space<vmem>>, %arg5: memref<32x1xf32, #tpu.memory_space<vmem>>, %arg6: memref<3x32xf32, #tpu.memory_space<vmem>>, %arg7: memref<3x1xf32, #tpu.memory_space<vmem>>, %arg8: memref<3x128xf32, #tpu.memory_space<vmem>>) attributes {dimension_semantics = [#tpu.dimension_semantics<parallel>], iteration_bounds = array<i64: 1>, scalar_prefetch = 0 : i64, scratch_operands = 0 : i64, tpu.core_type = #tpu.core_type<tc>, window_params = [{transform_indices = @transform_0, window_bounds = array<i64: 2, 128>}, {pipeline_mode = #tpu.pipeline_mode<synchronous>, transform_indices = @transform_1, window_bounds = array<i64: 32, 2>}, {pipeline_mode = #tpu.pipeline_mode<synchronous>, transform_indices = @transform_2, window_bounds = array<i64: 32, 1>}, {pipeline_mode = #tpu.pipeline_mode<synchronous>, transform_indices = @transform_3, window_bounds = array<i64: 32, 32>}, {pipeline_mode = #tpu.pipeline_mode<synchronous>, transform_indices = @transform_4, window_bounds = array<i64: 32, 1>}, {pipeline_mode = #tpu.pipeline_mode<synchronous>, transform_indices = @transform_5, window_bounds = array<i64: 3, 32>}, {pipeline_mode = #tpu.pipeline_mode<synchronous>, transform_indices = @transform_6, window_bounds = array<i64: 3, 1>}, {transform_indices = @transform_7, window_bounds = array<i64: 3, 128>}]} {
    %c0 = arith.constant 0 : index
    %c0_0 = arith.constant 0 : index
    %0 = vector.load %arg1[%c0, %c0_0] : memref<2x128xf32, #tpu.memory_space<vmem>>, vector<2x128xf32>
    %c0_1 = arith.constant 0 : index
    %c0_2 = arith.constant 0 : index
    %1 = vector.load %arg2[%c0_1, %c0_2] : memref<32x2xf32, #tpu.memory_space<vmem>>, vector<32x2xf32>
    %c0_3 = arith.constant 0 : index
    %c0_4 = arith.constant 0 : index
    %2 = vector.load %arg3[%c0_3, %c0_4] : memref<32x1xf32, #tpu.memory_space<vmem>>, vector<32x1xf32>
    %3 = vector.extract_strided_slice %1 {offsets = [0, 0], sizes = [32, 1], strides = [1, 1]} : vector<32x2xf32> to vector<32x1xf32>
    %4 = vector.extract_strided_slice %0 {offsets = [0, 0], sizes = [1, 128], strides = [1, 1]} : vector<2x128xf32> to vector<1x128xf32>
    %5 = vector.broadcast %3 : vector<32x1xf32> to vector<32x128xf32>
    %6 = vector.broadcast %4 : vector<1x128xf32> to vector<32x128xf32>
    %7 = arith.mulf %5, %6 : vector<32x128xf32>
    %8 = vector.extract_strided_slice %1 {offsets = [0, 1], sizes = [32, 1], strides = [1, 1]} : vector<32x2xf32> to vector<32x1xf32>
    %9 = vector.extract_strided_slice %0 {offsets = [1, 0], sizes = [1, 128], strides = [1, 1]} : vector<2x128xf32> to vector<1x128xf32>
    %10 = vector.broadcast %8 : vector<32x1xf32> to vector<32x128xf32>
    %11 = vector.broadcast %9 : vector<1x128xf32> to vector<32x128xf32>
    %12 = arith.mulf %10, %11 : vector<32x128xf32>
    %13 = arith.addf %7, %12 : vector<32x128xf32>
    %14 = vector.broadcast %2 : vector<32x1xf32> to vector<32x128xf32>
    %15 = arith.addf %13, %14 : vector<32x128xf32>
    %16 = arith.negf %15 : vector<32x128xf32>
    %17 = math.exp %16 : vector<32x128xf32>
    %cst = arith.constant 1.000000e+00 : f32
    %18 = vector.broadcast %cst : f32 to vector<32x128xf32>
    %19 = arith.addf %18, %17 : vector<32x128xf32>
    %20 = arith.divf %18, %19 : vector<32x128xf32>
    %c0_5 = arith.constant 0 : index
    %c0_6 = arith.constant 0 : index
    %21 = vector.load %arg4[%c0_5, %c0_6] : memref<32x32xf32, #tpu.memory_space<vmem>>, vector<32x32xf32>
    %cst_7 = arith.constant dense<0.000000e+00> : vector<32x128xf32>
    %22 = tpu.matmul %21, %20, %cst_7 {dimension_numbers = #tpu.dot_dimension_numbers<[1], [0], [0], [1], [0, 0, 1, 1], [], []>} : vector<32x32xf32>, vector<32x128xf32>, vector<32x128xf32> -> vector<32x128xf32>
    %c0_8 = arith.constant 0 : index
    %c0_9 = arith.constant 0 : index
    %23 = vector.load %arg5[%c0_8, %c0_9] : memref<32x1xf32, #tpu.memory_space<vmem>>, vector<32x1xf32>
    %24 = vector.broadcast %23 : vector<32x1xf32> to vector<32x128xf32>
    %25 = arith.addf %22, %24 : vector<32x128xf32>
    %26 = arith.negf %25 : vector<32x128xf32>
    %27 = math.exp %26 : vector<32x128xf32>
    %cst_10 = arith.constant 1.000000e+00 : f32
    %28 = vector.broadcast %cst_10 : f32 to vector<32x128xf32>
    %29 = arith.addf %28, %27 : vector<32x128xf32>
    %30 = arith.divf %28, %29 : vector<32x128xf32>
    %c0_11 = arith.constant 0 : index
    %c0_12 = arith.constant 0 : index
    %31 = vector.load %arg6[%c0_11, %c0_12] : memref<3x32xf32, #tpu.memory_space<vmem>>, vector<3x32xf32>
    %cst_13 = arith.constant dense<0.000000e+00> : vector<3x128xf32>
    %32 = tpu.matmul %31, %30, %cst_13 {dimension_numbers = #tpu.dot_dimension_numbers<[1], [0], [0], [1], [0, 0, 1, 1], [], []>} : vector<3x32xf32>, vector<32x128xf32>, vector<3x128xf32> -> vector<3x128xf32>
    %c0_14 = arith.constant 0 : index
    %c0_15 = arith.constant 0 : index
    %33 = vector.load %arg7[%c0_14, %c0_15] : memref<3x1xf32, #tpu.memory_space<vmem>>, vector<3x1xf32>
    %34 = vector.broadcast %33 : vector<3x1xf32> to vector<3x128xf32>
    %35 = arith.addf %32, %34 : vector<3x128xf32>
    %c0_16 = arith.constant 0 : index
    %c0_17 = arith.constant 0 : index
    %36 = vector.load %arg8[%c0_16, %c0_17] : memref<3x128xf32, #tpu.memory_space<vmem>>, vector<3x128xf32>
    tpu.vector_store %arg8[%c0_16, %c0_17], %35 {strides = array<i32>} : memref<3x128xf32, #tpu.memory_space<vmem>>, vector<3x128xf32>,
    return
  }
  func.func @transform_0(%arg0: i32) -> (i32, i32) {
    %c0_i32 = arith.constant 0 : i32
    %c0_i32_0 = arith.constant 0 : i32
    return %c0_i32, %arg0 : i32, i32
  }
  func.func @transform_1(%arg0: i32) -> (i32, i32) {
    %c0_i32 = arith.constant 0 : i32
    %c0_i32_0 = arith.constant 0 : i32
    %c0_i32_1 = arith.constant 0 : i32
    return %c0_i32, %c0_i32_0 : i32, i32
  }
  func.func @transform_2(%arg0: i32) -> (i32, i32) {
    %c0_i32 = arith.constant 0 : i32
    %c0_i32_0 = arith.constant 0 : i32
    %c0_i32_1 = arith.constant 0 : i32
    return %c0_i32, %c0_i32_0 : i32, i32
  }
  func.func @transform_3(%arg0: i32) -> (i32, i32) {
    %c0_i32 = arith.constant 0 : i32
    %c0_i32_0 = arith.constant 0 : i32
    %c0_i32_1 = arith.constant 0 : i32
    return %c0_i32, %c0_i32_0 : i32, i32
  }
  func.func @transform_4(%arg0: i32) -> (i32, i32) {
    %c0_i32 = arith.constant 0 : i32
    %c0_i32_0 = arith.constant 0 : i32
    %c0_i32_1 = arith.constant 0 : i32
    return %c0_i32, %c0_i32_0 : i32, i32
  }
  func.func @transform_5(%arg0: i32) -> (i32, i32) {
    %c0_i32 = arith.constant 0 : i32
    %c0_i32_0 = arith.constant 0 : i32
    %c0_i32_1 = arith.constant 0 : i32
    return %c0_i32, %c0_i32_0 : i32, i32
  }
  func.func @transform_6(%arg0: i32) -> (i32, i32) {
    %c0_i32 = arith.constant 0 : i32
    %c0_i32_0 = arith.constant 0 : i32
    %c0_i32_1 = arith.constant 0 : i32
    return %c0_i32, %c0_i32_0 : i32, i32
  }
  func.func @transform_7(%arg0: i32) -> (i32, i32) {
    %c0_i32 = arith.constant 0 : i32
    %c0_i32_0 = arith.constant 0 : i32
    return %c0_i32, %arg0 : i32, i32
  }
}

</mosaic_0001>

<llo_original>
// kernel: tpu_custom_call.1
$region0: #{tpu_custom_call.1}
  #allocation0 [shape = 'u32[]', space=smem, size = 0x4, offset = 0x4, fixed_abs, tag = 'smem constant byte address 0x4 - core index']
  #allocation1 [shape = 'u32[144,128]{1,0:T(1,128)}', space=vmem, size = 0x12000, scoped, tag = 'internal scratch']
  %s0 = inlined_call_operand.vmem [shape: f32[2,128], index: 0, kind: input, shape index: {}]
  %s1 = inlined_call_operand.vmem [shape: f32[32,2], index: 1, kind: input, shape index: {}]
  %s2 = inlined_call_operand.vmem [shape: f32[32,1], index: 2, kind: input, shape index: {}]
  %s3 = inlined_call_operand.vmem [shape: f32[32,32], index: 3, kind: input, shape index: {}]
  %s4 = inlined_call_operand.vmem [shape: f32[32,1], index: 4, kind: input, shape index: {}]
  %s5 = inlined_call_operand.vmem [shape: f32[3,32], index: 5, kind: input, shape index: {}]
  %s6 = inlined_call_operand.vmem [shape: f32[3,1], index: 6, kind: input, shape index: {}]
  %s7 = inlined_call_operand.hbm [shape: f32[3,128], index: 7, kind: output, shape index: {}]
  %s8 = sld [smem:[#allocation0]]
  $region38: #{tpu_custom_call.1} parent=0
    _
  %s10 = ssub.s32 1, %s8
  %s11 = scalar_select 0, %s10, %s8
  $region1: #{tpu_custom_call.1} parent=0
    #allocation2 [shape = 'u8[2048]{0}', space=vmem, size = 0x800, scoped, tag = 'output window, operand 0, single buffered']
    #allocation3 [shape = 's32[1]{0}', space=sflag, size = 0x4, scoped, tag = 'scoped memory for tpu_custom_call.1']
    %12 = vsyncpa [#allocation3], 0
    // Predicated region
    $region2: #{tpu_custom_call.1} parent=1 // pred_check
      _
    $region3: #{tpu_custom_call.1} parent=1 // pred_check_branch
      %14 = sbr.rel (0) target = $region5
    $region4: #{tpu_custom_call.1} parent=1 // pred_region
      _
    $region5: #{tpu_custom_call.1} parent=1 // pred_fallthru
      _
    // Predicated region
    $region6: #{tpu_custom_call.1} parent=1 // pred_check
      _
    $region7: #{tpu_custom_call.1} parent=1 // pred_check_branch
      %16 = sbr.rel (0) target = $region9
    $region8: #{tpu_custom_call.1} parent=1 // pred_region
      _
    $region9: #{tpu_custom_call.1} parent=1 // pred_fallthru
      _
    // Predicated region
    $region10: #{tpu_custom_call.1} parent=1 // pred_check
      _
    $region11: #{tpu_custom_call.1} parent=1 // pred_check_branch
      %18 = sbr.rel (0) target = $region13
    $region12: #{tpu_custom_call.1} parent=1 // pred_region
      _
    $region13: #{tpu_custom_call.1} parent=1 // pred_fallthru
      _
    // Predicated region
    $region14: #{tpu_custom_call.1} parent=1 // pred_check
      _
    $region15: #{tpu_custom_call.1} parent=1 // pred_check_branch
      %20 = sbr.rel (0) target = $region17
    $region16: #{tpu_custom_call.1} parent=1 // pred_region
      _
    $region17: #{tpu_custom_call.1} parent=1 // pred_fallthru
      _
    // Predicated region
    $region18: #{tpu_custom_call.1} parent=1 // pred_check
      _
    $region19: #{tpu_custom_call.1} parent=1 // pred_check_branch
      %22 = sbr.rel (0) target = $region21
    $region20: #{tpu_custom_call.1} parent=1 // pred_region
      _
    $region21: #{tpu_custom_call.1} parent=1 // pred_fallthru
      _
    // Predicated region
    $region22: #{tpu_custom_call.1} parent=1 // pred_check
      _
    $region23: #{tpu_custom_call.1} parent=1 // pred_check_branch
      %24 = sbr.rel (0) target = $region25
    $region24: #{tpu_custom_call.1} parent=1 // pred_region
      _
    $region25: #{tpu_custom_call.1} parent=1 // pred_fallthru
      _
    // Predicated region
    $region26: #{tpu_custom_call.1} parent=1 // pred_check
      _
    $region27: #{tpu_custom_call.1} parent=1 // pred_check_branch
      %26 = sbr.rel (0) target = $region29
    $region28: #{tpu_custom_call.1} parent=1 // pred_region
      _
    $region29: #{tpu_custom_call.1} parent=1 // pred_fallthru
      _
    %v27 = vld [vmem:[%s0] sm:$0x3]
    %v28 = vld [vmem:[%s1] sm:$0xff]
    %v29 = vld [vmem:[%s1 + $0x8] sm:$0xff]
    %v30 = vld [vmem:[%s1 + $0x10] sm:$0xff]
    %v31 = vld [vmem:[%s1 + $0x18] sm:$0xff]
    %v32 = vld [vmem:[%s2] sm:$0xff]
    %v33 = vld [vmem:[%s2 + $0x8] sm:$0xff]
    %v34 = vld [vmem:[%s2 + $0x10] sm:$0xff]
    %v35 = vld [vmem:[%s2 + $0x18] sm:$0xff]
    %37 = vset.pattern.permute.xlu0 0
    %38 = vperm.xlu0 %37, %v28
    %v39 = vpop.permute.xlu0 %38
    %42 = vset.pattern.permute.xlu0 0
    %43 = vperm.xlu0 %42, %v29
    %v44 = vpop.permute.xlu0 %43
    %47 = vset.pattern.permute.xlu0 0
    %48 = vperm.xlu0 %47, %v30
    %v49 = vpop.permute.xlu0 %48
    %52 = vset.pattern.permute.xlu0 0
    %53 = vperm.xlu0 %52, %v31
    %v54 = vpop.permute.xlu0 %53
    %v56 = vlaneseq
    %v57 = vshrl.u32 %v56, 7
    %v58 = vsub.s32 0, %v57
    %v59 = vrot.slane %v27, %v58
    %v60 = vmul.f32 %v39, %v59
    %v61 = vmul.f32 %v44, %v59
    %v62 = vmul.f32 %v49, %v59
    %v63 = vmul.f32 %v54, %v59
    %64 = vset.pattern.permute.xlu0 1
    %65 = vperm.xlu0 %64, %v28
    %v66 = vpop.permute.xlu0 %65
    %68 = vset.pattern.permute.xlu0 1
    %69 = vperm.xlu0 %68, %v29
    %v70 = vpop.permute.xlu0 %69
    %72 = vset.pattern.permute.xlu0 1
    %73 = vperm.xlu0 %72, %v30
    %v74 = vpop.permute.xlu0 %73
    %76 = vset.pattern.permute.xlu0 1
    %77 = vperm.xlu0 %76, %v31
    %v78 = vpop.permute.xlu0 %77
    %v80 = vlaneseq
    %v81 = vshrl.u32 %v80, 7
    %v82 = vsub.s32 1, %v81
    %v83 = vrot.slane %v27, %v82
    %v84 = vmul.f32 %v66, %v83
    %v85 = vmul.f32 %v70, %v83
    %v86 = vmul.f32 %v74, %v83
    %v87 = vmul.f32 %v78, %v83
    %v88 = vadd.f32 %v60, %v84
    %v89 = vadd.f32 %v61, %v85
    %v90 = vadd.f32 %v62, %v86
    %v91 = vadd.f32 %v63, %v87
    %93 = vset.pattern.permute.xlu0 0
    %94 = vperm.xlu0 %93, %v32
    %v95 = vpop.permute.xlu0 %94
    %98 = vset.pattern.permute.xlu0 0
    %99 = vperm.xlu0 %98, %v33
    %v100 = vpop.permute.xlu0 %99
    %103 = vset.pattern.permute.xlu0 0
    %104 = vperm.xlu0 %103, %v34
    %v105 = vpop.permute.xlu0 %104
    %108 = vset.pattern.permute.xlu0 0
    %109 = vperm.xlu0 %108, %v35
    %v110 = vpop.permute.xlu0 %109
    %v112 = vadd.f32 %v88, %v95
    %v113 = vadd.f32 %v89, %v100
    %v114 = vadd.f32 %v90, %v105
    %v115 = vadd.f32 %v91, %v110
    %v116 = vxor.u32 %v112, 2147483648
    %v117 = vxor.u32 %v113, 2147483648
    %v118 = vxor.u32 %v114, 2147483648
    %v119 = vxor.u32 %v115, 2147483648
    %v120 = vmul.f32 %v116, 1.442695
    %v121 = vpow.pop %v120
    %v122 = vmul.f32 %v117, 1.442695
    %v123 = vpow.pop %v122
    %v124 = vmul.f32 %v118, 1.442695
    %v125 = vpow.pop %v124
    %v126 = vmul.f32 %v119, 1.442695
    %v127 = vpow.pop %v126
    %v128 = vadd.f32 %v121, 1.0
    %v129 = vadd.f32 %v123, 1.0
    %v130 = vadd.f32 %v125, 1.0
    %v131 = vadd.f32 %v127, 1.0
    %v132 = vrcp.pop %v128
    %v133 = vmul.f32 1.0, %v132
    %v134 = vrcp.pop %v129
    %v135 = vmul.f32 1.0, %v134
    %v136 = vrcp.pop %v130
    %v137 = vmul.f32 1.0, %v136
    %v138 = vrcp.pop %v131
    %v139 = vmul.f32 1.0, %v138
    %v140 = vld [vmem:[%s3] sm:$0xff]
    %v141 = vld [vmem:[%s3 + $0x8] sm:$0xff]
    %v142 = vld [vmem:[%s3 + $0x10] sm:$0xff]
    %v143 = vld [vmem:[%s3 + $0x18] sm:$0xff]
    %v144 = vld [vmem:[%s4] sm:$0xff]
    %v145 = vld [vmem:[%s4 + $0x8] sm:$0xff]
    %v146 = vld [vmem:[%s4 + $0x10] sm:$0xff]
    %v147 = vld [vmem:[%s4 + $0x18] sm:$0xff]
    %149 = vset.pattern.permute.xlu0 0
    %150 = vperm.xlu0 %149, %v144
    %v151 = vpop.permute.xlu0 %150
    %154 = vset.pattern.permute.xlu0 0
    %155 = vperm.xlu0 %154, %v145
    %v156 = vpop.permute.xlu0 %155
    %159 = vset.pattern.permute.xlu0 0
    %160 = vperm.xlu0 %159, %v146
    %v161 = vpop.permute.xlu0 %160
    %164 = vset.pattern.permute.xlu0 0
    %165 = vperm.xlu0 %164, %v147
    %v166 = vpop.permute.xlu0 %165
    %vm168 = vcmask 261120
    %v170 = vsel %vm168, %v140, 0
    %v173 = vsel %vm168, %v141, 0
    %v176 = vsel %vm168, %v142, 0
    %v179 = vsel %vm168, %v143, 0
    %181 = vmatprep.subr.mxu0 0.0
    %182 = vmatpush1.msra.mxu0 %v133
    %183 = vmatprep.subr.mxu0 0.0
    %184 = vmatpush1.msra.mxu0 %v135
    %185 = vmatprep.subr.mxu0 0.0
    %186 = vmatpush1.msra.mxu0 %v137
    %187 = vmatprep.subr.mxu0 0.0
    %188 = vmatpush1.msra.mxu0 %v139
    %189 = vmatprep.subr.mxu0 0.0
    %190 = vmatpush1.msra.mxu0 0.0
    %191 = vmatprep.subr.mxu0 0.0
    %192 = vmatpush1.msra.mxu0 0.0
    %193 = vmatprep.subr.mxu0 0.0
    %194 = vmatpush1.msra.mxu0 0.0
    %195 = vmatprep.subr.mxu0 0.0
    %196 = vmatpush1.msra.mxu0 0.0
    %197 = vmatprep.subr.mxu0 0.0
    %198 = vmatpush1.msra.mxu0 0.0
    %199 = vmatprep.subr.mxu0 0.0
    %200 = vmatpush1.msra.mxu0 0.0
    %201 = vmatprep.subr.mxu0 0.0
    %202 = vmatpush1.msra.mxu0 0.0
    %203 = vmatprep.subr.mxu0 0.0
    %204 = vmatpush1.msra.mxu0 0.0
    %205 = vmatprep.subr.mxu0 0.0
    %206 = vmatpush1.msra.mxu0 0.0
    %207 = vmatprep.subr.mxu0 0.0
    %208 = vmatpush1.msra.mxu0 0.0
    %209 = vmatprep.subr.mxu0 0.0
    %210 = vmatpush1.msra.mxu0 0.0
    %211 = vmatprep.subr.mxu0 0.0
    %212 = vmatpush1.msra.mxu0 0.0
    %213 = vmatprep.subr.mxu0 0.0
    %214 = vmatpush1.msra.mxu0 0.0
    %215 = vmatprep.subr.mxu0 0.0
    %216 = vmatpush1.msra.mxu0 0.0
    %217 = vmatprep.subr.mxu0 0.0
    %218 = vmatpush1.msra.mxu0 0.0
    %219 = vmatprep.subr.mxu0 0.0
    %220 = vmatpush1.msra.mxu0 0.0
    %221 = vmatprep.subr.mxu0 0.0
    %222 = vmatpush1.msra.mxu0 0.0
    %223 = vmatprep.subr.mxu0 0.0
    %224 = vmatpush1.msra.mxu0 0.0
    %225 = vmatprep.subr.mxu0 0.0
    %226 = vmatpush1.msra.mxu0 0.0
    %227 = vmatprep.subr.mxu0 0.0
    %228 = vmatpush1.msra.mxu0 0.0
    %229 = vmatprep.subr.mxu0 0.0
    %230 = vmatpush1.msra.mxu0 0.0
    %231 = vmatprep.subr.mxu0 0.0
    %232 = vmatpush1.msra.mxu0 0.0
    %233 = vmatprep.subr.mxu0 0.0
    %234 = vmatpush1.msra.mxu0 0.0
    %235 = vmatprep.subr.mxu0 0.0
    %236 = vmatpush1.msra.mxu0 0.0
    %237 = vmatprep.subr.mxu0 0.0
    %238 = vmatpush1.msra.mxu0 0.0
    %239 = vmatprep.subr.mxu0 0.0
    %240 = vmatpush1.msra.mxu0 0.0
    %241 = vmatprep.subr.mxu0 0.0
    %242 = vmatpush1.msra.mxu0 0.0
    %243 = vmatprep.subr.mxu0 0.0
    %244 = vmatpush1.msra.mxu0 0.0
    %245 = vmatprep.mubr.f32.mxu0 0.0
    %246 = vmatmul.mubr.f32.gmra.mrb[0].mxu0 %v170
    %v247 = vpop.f32.mrb[0].mxu0
    %v248 = vadd.f32 %v151, %v247
    %v249 = vpop.f32.mrb[0].mxu0
    %250 = vmatprep.mubr.f32.mxu0 0.0
    %251 = vmatmul.mubr.f32.gmra.mrb[0].mxu0 %v173
    %v252 = vpop.f32.mrb[0].mxu0
    %v253 = vadd.f32 %v156, %v252
    %v254 = vpop.f32.mrb[0].mxu0
    %255 = vmatprep.mubr.f32.mxu0 0.0
    %256 = vmatmul.mubr.f32.gmra.mrb[0].mxu0 %v176
    %v257 = vpop.f32.mrb[0].mxu0
    %v258 = vadd.f32 %v161, %v257
    %v259 = vpop.f32.mrb[0].mxu0
    %260 = vmatprep.mubr.f32.mxu0 0.0
    %261 = vmatmul.mubr.f32.gmra.mrb[0].mxu0 %v179
    %v262 = vpop.f32.mrb[0].mxu0
    %v263 = vadd.f32 %v166, %v262
    %v264 = vpop.f32.mrb[0].mxu0
    %265 = vdwg.mxu0
    %v266 = vxor.u32 %v248, 2147483648
    %v267 = vxor.u32 %v253, 2147483648
    %v268 = vxor.u32 %v258, 2147483648
    %v269 = vxor.u32 %v263, 2147483648
    %v270 = vmul.f32 %v266, 1.442695
    %v271 = vpow.pop %v270
    %v272 = vmul.f32 %v267, 1.442695
    %v273 = vpow.pop %v272
    %v274 = vmul.f32 %v268, 1.442695
    %v275 = vpow.pop %v274
    %v276 = vmul.f32 %v269, 1.442695
    %v277 = vpow.pop %v276
    %v278 = vadd.f32 %v271, 1.0
    %v279 = vadd.f32 %v273, 1.0
    %v280 = vadd.f32 %v275, 1.0
    %v281 = vadd.f32 %v277, 1.0
    %v282 = vrcp.pop %v278
    %v283 = vmul.f32 1.0, %v282
    %v284 = vrcp.pop %v279
    %v285 = vmul.f32 1.0, %v284
    %v286 = vrcp.pop %v280
    %v287 = vmul.f32 1.0, %v286
    %v288 = vrcp.pop %v281
    %v289 = vmul.f32 1.0, %v288
    %v290 = vld [vmem:[%s5] sm:$0x7]
    %v291 = vld [vmem:[%s6] sm:$0x7]
    %293 = vset.pattern.permute.xlu0 0
    %294 = vperm.xlu0 %293, %v291
    %v295 = vpop.permute.xlu0 %294
    %v298 = vsel %vm168, %v290, 0
    %300 = vmatprep.subr.mxu0 0.0
    %301 = vmatpush1.msra.mxu0 %v283
    %302 = vmatprep.subr.mxu0 0.0
    %303 = vmatpush1.msra.mxu0 %v285
    %304 = vmatprep.subr.mxu0 0.0
    %305 = vmatpush1.msra.mxu0 %v287
    %306 = vmatprep.subr.mxu0 0.0
    %307 = vmatpush1.msra.mxu0 %v289
    %308 = vmatprep.subr.mxu0 0.0
    %309 = vmatpush1.msra.mxu0 0.0
    %310 = vmatprep.subr.mxu0 0.0
    %311 = vmatpush1.msra.mxu0 0.0
    %312 = vmatprep.subr.mxu0 0.0
    %313 = vmatpush1.msra.mxu0 0.0
    %314 = vmatprep.subr.mxu0 0.0
    %315 = vmatpush1.msra.mxu0 0.0
    %316 = vmatprep.subr.mxu0 0.0
    %317 = vmatpush1.msra.mxu0 0.0
    %318 = vmatprep.subr.mxu0 0.0
    %319 = vmatpush1.msra.mxu0 0.0
    %320 = vmatprep.subr.mxu0 0.0
    %321 = vmatpush1.msra.mxu0 0.0
    %322 = vmatprep.subr.mxu0 0.0
    %323 = vmatpush1.msra.mxu0 0.0
    %324 = vmatprep.subr.mxu0 0.0
    %325 = vmatpush1.msra.mxu0 0.0
    %326 = vmatprep.subr.mxu0 0.0
    %327 = vmatpush1.msra.mxu0 0.0
    %328 = vmatprep.subr.mxu0 0.0
    %329 = vmatpush1.msra.mxu0 0.0
    %330 = vmatprep.subr.mxu0 0.0
    %331 = vmatpush1.msra.mxu0 0.0
    %332 = vmatprep.subr.mxu0 0.0
    %333 = vmatpush1.msra.mxu0 0.0
    %334 = vmatprep.subr.mxu0 0.0
    %335 = vmatpush1.msra.mxu0 0.0
    %336 = vmatprep.subr.mxu0 0.0
    %337 = vmatpush1.msra.mxu0 0.0
    %338 = vmatprep.subr.mxu0 0.0
    %339 = vmatpush1.msra.mxu0 0.0
    %340 = vmatprep.subr.mxu0 0.0
    %341 = vmatpush1.msra.mxu0 0.0
    %342 = vmatprep.subr.mxu0 0.0
    %343 = vmatpush1.msra.mxu0 0.0
    %344 = vmatprep.subr.mxu0 0.0
    %345 = vmatpush1.msra.mxu0 0.0
    %346 = vmatprep.subr.mxu0 0.0
    %347 = vmatpush1.msra.mxu0 0.0
    %348 = vmatprep.subr.mxu0 0.0
    %349 = vmatpush1.msra.mxu0 0.0
    %350 = vmatprep.subr.mxu0 0.0
    %351 = vmatpush1.msra.mxu0 0.0
    %352 = vmatprep.subr.mxu0 0.0
    %353 = vmatpush1.msra.mxu0 0.0
    %354 = vmatprep.subr.mxu0 0.0
    %355 = vmatpush1.msra.mxu0 0.0
    %356 = vmatprep.subr.mxu0 0.0
    %357 = vmatpush1.msra.mxu0 0.0
    %358 = vmatprep.subr.mxu0 0.0
    %359 = vmatpush1.msra.mxu0 0.0
    %360 = vmatprep.subr.mxu0 0.0
    %361 = vmatpush1.msra.mxu0 0.0
    %362 = vmatprep.subr.mxu0 0.0
    %363 = vmatpush1.msra.mxu0 0.0
    %364 = vmatprep.mubr.f32.mxu0 0.0
    %365 = vmatmul.mubr.f32.gmra.mrb[0].mxu0 %v298
    %v366 = vpop.f32.mrb[0].mxu0
    %v367 = vadd.f32 %v295, %v366
    %v368 = vpop.f32.mrb[0].mxu0
    %369 = vdwg.mxu0
    %370 = vst [vmem:[#allocation2] sm:$0x7] %v367
    // Predicated region
    $region30: #{tpu_custom_call.1} parent=1 // pred_check
      _
    $region31: #{tpu_custom_call.1} parent=1 // pred_check_branch
      %372 = sbr.rel (0) target = $region33
    $region32: #{tpu_custom_call.1} parent=1 // pred_region
      %s374 = ssub.s32 64, 64
      %375 = vsyncadd [#allocation3], %s374
      %s377 = sshll.u32 [#allocation2], 4
      %s378 = int_to_ptr.vmem [resolvable:$true] %s377
      %380 = dma.vmem_to_hbm [thread:$0]  %s378, 64, %s7, [#allocation3]
    $region33: #{tpu_custom_call.1} parent=1 // pred_fallthru
      _
    // Predicated region
    $region34: #{tpu_custom_call.1} parent=1 // pred_check
      _
    $region35: #{tpu_custom_call.1} parent=1 // pred_check_branch
      %382 = sbr.rel (0) target = $region37
    $region36: #{tpu_custom_call.1} parent=1 // pred_region
      %383 = dma.done [#allocation3], 64
    $region37: #{tpu_custom_call.1} parent=1 // pred_fallthru
      _
    %384 = vsyncpa [#allocation3], 1

</llo_original>
